<compile_context>
chip_gen: v7x
topology: tpu7x:2x2x1
jax: 0.10.0
libtpu: 0.0.40
codegen_flags: <defaults>
</compile_context>

<pallas_src>
import math

import jax
import jax.numpy as jnp
from jax.experimental import pallas as pl
from jax.experimental.pallas import tpu as pltpu


# ----------------------------- kernels -----------------------------

def _mm_kernel_single_k(x_ref, w_ref, o_ref):
    # Whole K fits in one tile: no reduction axis, no scratch, single MXU dot.
    o_ref[...] = jnp.dot(
        x_ref[...], w_ref[...], preferred_element_type=jnp.float32
    ).astype(o_ref.dtype)


def _mm_kernel_acc_inplace(x_ref, w_ref, o_ref):
    # f32 output: accumulate directly into the resident output block.
    # (output index_map ignores k, so the block stays in VMEM across K steps
    #  and is written back to HBM only when the (i, j) tile changes).
    @pl.when(pl.program_id(2) == 0)
    def _():
        o_ref[...] = jnp.zeros_like(o_ref)

    o_ref[...] += jnp.dot(
        x_ref[...], w_ref[...], preferred_element_type=jnp.float32
    )


def _mm_kernel_acc_scratch(x_ref, w_ref, o_ref, acc_ref):
    # Non-f32 output: accumulate in f32 scratch, cast once on the last K step.
    @pl.when(pl.program_id(2) == 0)
    def _():
        acc_ref[...] = jnp.zeros_like(acc_ref)

    acc_ref[...] += jnp.dot(
        x_ref[...], w_ref[...], preferred_element_type=jnp.float32
    )

    @pl.when(pl.program_id(2) == pl.num_programs(2) - 1)
    def _():
        o_ref[...] = acc_ref[...].astype(o_ref.dtype)


# ----------------------------- wrapper -----------------------------

# Below this many MAC ops, pallas_call fixed overhead dwarfs the compute;
# plain XLA dot is strictly faster on every TPU generation.
_SMALL_PROBLEM_MACS = 1 << 20


def linear_matmul_pallas(x, weights, *, tm=None, tn=None, tk=None,
                         force_pallas=False):
    """Computes x @ weights with a tiled Pallas TPU matmul kernel.

    x:       [M, K]  (M tokens, K = num_channels_in)
    weights: [K, N]  (N = num_channels_out), already scaled by 1/sqrt(K)
    returns: [M, N]  in x.dtype
    """
    M, K = x.shape
    K2, N = weights.shape
    assert K == K2, (K, K2)
    out_dtype = x.dtype

    # Tiny-problem escape hatch: skip the Pallas call entirely.
    if not force_pallas and (M * N * K) < _SMALL_PROBLEM_MACS:
        return jnp.dot(x, weights).astype(out_dtype)

    # --- Tile selection: large, MXU-friendly tiles (256-multiples feed the
    # 2x256x256 MXU on v6e/v7x, still 128-aligned for v5e's 4x128x128) that
    # amortize grid-step overhead (~0.35 us/step) and cut HBM re-reads, while
    # the total double-buffered footprint stays far under v7x's 64 MiB VMEM.
    tm = tm or min(M, 512)
    tn = tn or min(N, 512)
    tk = tk or min(K, 512)

    # Keep >=2 blocks on at least one parallel axis so the grid can shard
    # across v7x's two TensorCores (prefer splitting N when M is small:
    # output stays lane-dense as long as tn is a multiple of 128).
    if pl.cdiv(M, tm) == 1 and pl.cdiv(N, tn) == 1 and N >= 256:
        tn = max(128, tn // 2)

    # --- Pad ragged edges up to tile multiples (zero-padding K is exact);
    # slice the valid region back out at the end.
    Mp = pl.cdiv(M, tm) * tm
    Np = pl.cdiv(N, tn) * tn
    Kp = pl.cdiv(K, tk) * tk
    if (Mp, Kp) != (M, K):
        x = jnp.pad(x, ((0, Mp - M), (0, Kp - K)))
    if (Kp, Np) != (K, N):
        weights = jnp.pad(weights, ((0, Kp - K), (0, Np - N)))

    m_blocks, n_blocks, k_blocks = Mp // tm, Np // tn, Kp // tk

    # Raise the scoped VMEM limit enough for the double-buffered tiles
    # (+ f32 accumulator + headroom); stays well under v7x's 64 MiB physical.
    x_isz = jnp.dtype(x.dtype).itemsize
    w_isz = jnp.dtype(weights.dtype).itemsize
    o_isz = jnp.dtype(out_dtype).itemsize
    vmem_needed = 2 * (tm * tk * x_isz + tk * tn * w_isz + tm * tn * o_isz) \
        + tm * tn * 4
    vmem_limit = int(max(vmem_needed + (8 << 20), 32 << 20))

    # Advisory cost estimate so XLA schedules around the custom call sensibly.
    cost = pl.CostEstimate(
        flops=2 * Mp * Np * Kp,
        transcendentals=0,
        bytes_accessed=Mp * Kp * x_isz + Kp * Np * w_isz + Mp * Np * o_isz,
    )

    if k_blocks == 1:
        # No-reduction fast path: drop the K grid axis, scratch and pl.when's.
        grid = (m_blocks, n_blocks)
        kernel = _mm_kernel_single_k
        in_specs = [
            pl.BlockSpec((tm, Kp), lambda i, j: (i, 0)),
            pl.BlockSpec((Kp, tn), lambda i, j: (0, j)),
        ]
        out_specs = pl.BlockSpec((tm, tn), lambda i, j: (i, j))
        scratch_shapes = []
        dim_sem = ("parallel", "parallel")
    else:
        # Reduction axis (K) last in the grid by convention.
        grid = (m_blocks, n_blocks, k_blocks)
        in_specs = [
            pl.BlockSpec((tm, tk), lambda i, j, k: (i, k)),
            pl.BlockSpec((tk, tn), lambda i, j, k: (k, j)),
        ]
        out_specs = pl.BlockSpec((tm, tn), lambda i, j, k: (i, j))
        dim_sem = ("parallel", "parallel", "arbitrary")
        if jnp.dtype(out_dtype) == jnp.dtype(jnp.float32):
            # f32 output: accumulate straight into the output block, no scratch.
            kernel = _mm_kernel_acc_inplace
            scratch_shapes = []
        else:
            kernel = _mm_kernel_acc_scratch
            scratch_shapes = [pltpu.VMEM((tm, tn), jnp.float32)]

    out_padded = pl.pallas_call(
        kernel,
        out_shape=jax.ShapeDtypeStruct((Mp, Np), out_dtype),
        grid_spec=pltpu.PrefetchScalarGridSpec(
            num_scalar_prefetch=0,
            grid=grid,
            in_specs=in_specs,
            out_specs=out_specs,
            scratch_shapes=scratch_shapes,
        ),
        compiler_params=pltpu.CompilerParams(
            dimension_semantics=dim_sem,
            vmem_limit_bytes=vmem_limit,
        ),
        cost_estimate=cost,
    )(x, weights)

    if (Mp, Np) != (M, N):
        out_padded = out_padded[:M, :N]
    return out_padded


class LinearMatmul:
    """JAX port of cuda_mace linear_matmul.

    Takes an e3nn Linear's flat weight of shape
    [num_channels_in * num_channels_out], reshapes it to
    [num_channels_in, num_channels_out], and divides by sqrt(num_channels_in).
    Optionally pre-cast the weights ONCE to a compute dtype (e.g. bf16 for
    full MXU throughput on v6e/v7x) instead of casting every call.
    """

    def __init__(self, flat_weight, num_channels_in, num_channels_out,
                 compute_dtype=None):
        w = jnp.asarray(flat_weight).reshape(num_channels_in, num_channels_out)
        w = w / math.sqrt(num_channels_in)
        if compute_dtype is not None:
            w = w.astype(compute_dtype)
        self.weights = w

    def __call__(self, x):
        w = self.weights
        if w.dtype != x.dtype:  # rare path; normally pre-cast at __init__
            w = w.astype(x.dtype)
        return linear_matmul_pallas(x, w)


if __name__ == "__main__":
    key = jax.random.PRNGKey(0)
    k_x, k_w, k_x2, k_w2, k_x3, k_w3, k_x5, k_w5 = jax.random.split(key, 8)

    # ---- 1) Tiny module-scale case (matches the original example): this takes
    #         the small-problem escape hatch (plain XLA dot).
    cin, cout, ntok = 32, 64, 16
    flat_w = jax.random.normal(k_w, (cin * cout,), dtype=jnp.float32)
    mod_tiny = LinearMatmul(flat_w, cin, cout)
    x_tiny = jax.random.normal(k_x, (ntok, cin), dtype=jnp.float32)
    out_tiny = jax.block_until_ready(mod_tiny(x_tiny))
    ref_tiny = x_tiny @ mod_tiny.weights
    assert out_tiny.shape == (ntok, cout)
    assert jnp.allclose(out_tiny, ref_tiny, atol=1e-5, rtol=1e-5)

    # ---- 2) Pallas no-reduction path (single K tile, f32), exercises the
    #         2-TC grid heuristic (N split into two 128-wide blocks).
    cin2, cout2, ntok2 = 128, 256, 256
    flat_w2 = jax.random.normal(k_w2, (cin2 * cout2,), dtype=jnp.float32)
    mod_big = LinearMatmul(flat_w2, cin2, cout2)
    x_big = jax.random.normal(k_x2, (ntok2, cin2), dtype=jnp.float32)
    out_big = jax.block_until_ready(mod_big(x_big))
    ref_big = x_big @ mod_big.weights
    assert out_big.shape == (ntok2, cout2)
    assert jnp.allclose(out_big, ref_big, atol=1e-4, rtol=1e-4)

    # ---- 3) Pallas K-reduction path (f32 -> accumulate-in-output kernel).
    M3, K3, N3 = 256, 256, 256
    x3 = jax.random.normal(k_x3, (M3, K3), dtype=jnp.float32)
    w3 = jax.random.normal(k_w3, (K3, N3), dtype=jnp.float32) / math.sqrt(K3)
    out3 = jax.block_until_ready(
        linear_matmul_pallas(x3, w3, tm=128, tn=128, tk=128, force_pallas=True)
    )
    ref3 = x3 @ w3
    assert jnp.allclose(out3, ref3, atol=1e-4, rtol=1e-4)

    # ---- 4) Pallas K-reduction path with bf16 operands (f32-scratch kernel).
    x3b = x3.astype(jnp.bfloat16)
    w3b = w3.astype(jnp.bfloat16)
    out3b = jax.block_until_ready(
        linear_matmul_pallas(x3b, w3b, tm=128, tn=128, tk=128, force_pallas=True)
    )
    assert out3b.dtype == jnp.bfloat16
    assert jnp.allclose(out3b.astype(jnp.float32), ref3, atol=5e-2, rtol=5e-2)

    # ---- 5) Ragged shapes: forces zero-padding to tile multiples + slice-back.
    M5, K5, N5 = 200, 96, 160
    x5 = jax.random.normal(k_x5, (M5, K5), dtype=jnp.float32)
    w5 = jax.random.normal(k_w5, (K5, N5), dtype=jnp.float32) / math.sqrt(K5)
    out5 = jax.block_until_ready(
        linear_matmul_pallas(x5, w5, tm=128, tn=128, tk=128, force_pallas=True)
    )
    ref5 = x5 @ w5
    assert out5.shape == (M5, N5)
    assert jnp.allclose(out5, ref5, atol=1e-4, rtol=1e-4)

    print("KERNEL_OK")
</pallas_src>

<mosaic_0001>
module attributes {stable_mosaic.version = 11 : i64} {
  func.func @_mm_kernel_single_k(%arg0: i32, %arg1: i32, %arg2: memref<256x128xf32, #tpu.memory_space<vmem>>, %arg3: memref<128x128xf32, #tpu.memory_space<vmem>>, %arg4: memref<256x128xf32, #tpu.memory_space<vmem>>) attributes {dimension_semantics = [#tpu.dimension_semantics<parallel>, #tpu.dimension_semantics<parallel>], iteration_bounds = array<i64: 1, 2>, scalar_prefetch = 0 : i64, scratch_operands = 0 : i64, tpu.core_type = #tpu.core_type<tc>, window_params = [{transform_indices = @transform_0, window_bounds = array<i64: 256, 128>}, {transform_indices = @transform_1, window_bounds = array<i64: 128, 128>}, {transform_indices = @transform_2, window_bounds = array<i64: 256, 128>}]} {
    %c0 = arith.constant 0 : index
    %c0_0 = arith.constant 0 : index
    %0 = vector.load %arg2[%c0, %c0_0] : memref<256x128xf32, #tpu.memory_space<vmem>>, vector<256x128xf32>
    %c0_1 = arith.constant 0 : index
    %c0_2 = arith.constant 0 : index
    %1 = vector.load %arg3[%c0_1, %c0_2] : memref<128x128xf32, #tpu.memory_space<vmem>>, vector<128x128xf32>
    %cst = arith.constant dense<0.000000e+00> : vector<256x128xf32>
    %2 = tpu.matmul %0, %1, %cst {dimension_numbers = #tpu.dot_dimension_numbers<[1], [0], [0], [1], [0, 0, 1, 1], [], []>} : vector<256x128xf32>, vector<128x128xf32>, vector<256x128xf32> -> vector<256x128xf32>
    %c0_3 = arith.constant 0 : index
    %c0_4 = arith.constant 0 : index
    %3 = vector.load %arg4[%c0_3, %c0_4] : memref<256x128xf32, #tpu.memory_space<vmem>>, vector<256x128xf32>
    tpu.vector_store %arg4[%c0_3, %c0_4], %2 {strides = array<i32>} : memref<256x128xf32, #tpu.memory_space<vmem>>, vector<256x128xf32>,
    return
  }
  func.func @transform_0(%arg0: i32, %arg1: i32) -> (i32, i32) {
    %c0_i32 = arith.constant 0 : i32
    %c0_i32_0 = arith.constant 0 : i32
    return %arg0, %c0_i32 : i32, i32
  }
  func.func @transform_1(%arg0: i32, %arg1: i32) -> (i32, i32) {
    %c0_i32 = arith.constant 0 : i32
    %c0_i32_0 = arith.constant 0 : i32
    return %c0_i32, %arg1 : i32, i32
  }
  func.func @transform_2(%arg0: i32, %arg1: i32) -> (i32, i32) {
    %c0_i32 = arith.constant 0 : i32
    return %arg0, %arg1 : i32, i32
  }
}

</mosaic_0001>

<llo_original>
// kernel: tpu_custom_call.1
$region0: #{tpu_custom_call.1}
  #allocation0 [shape = 'u32[]', space=smem, size = 0x4, offset = 0x4, fixed_abs, tag = 'smem constant byte address 0x4 - core index']
  #allocation1 [shape = 'u32[144,128]{1,0:T(1,128)}', space=vmem, size = 0x12000, scoped, tag = 'internal scratch']
  %s0 = inlined_call_operand.hbm [shape: f32[256,128], index: 0, kind: input, shape index: {}]
  %s1 = inlined_call_operand.hbm [shape: f32[128,256], index: 1, kind: input, shape index: {}]
  %s2 = inlined_call_operand.hbm [shape: f32[256,256], index: 2, kind: output, shape index: {}]
  %s3 = sld [smem:[#allocation0]]
  $region49: #{tpu_custom_call.1} parent=0
    _
  %s5 = ssub.s32 1, %s3
  %s6 = scalar_select 0, %s5, %s3
  $region1: #{tpu_custom_call.1} parent=0
    #allocation2 [shape = 'u8[131072]{0}', space=vmem, size = 0x20000, scoped, tag = 'input window, operand 0, single buffered']
    #allocation3 [shape = 's32[2]{0}', space=sflag, size = 0x8, scoped, tag = 'scoped memory for tpu_custom_call.1']
    #allocation4 [shape = 's32[2]{0}', space=sflag, size = 0x8, scoped, tag = 'scoped memory for tpu_custom_call.1']
    #allocation5 [shape = 'u8[131072]{0}', space=vmem, size = 0x20000, scoped, tag = 'input window, operand 1']
    #allocation6 [shape = 's32[2]{0}', space=sflag, size = 0x8, scoped, tag = 'scoped memory for tpu_custom_call.1']
    #allocation7 [shape = 'u8[262144]{0}', space=vmem, size = 0x40000, scoped, tag = 'output window, operand 0']
    %7 = vsyncpa [#allocation3], 0
    %8 = vsyncpa [#allocation6], 0
    %s9 = scalar_lea.sflag [#allocation6], 1
    %10 = vsyncpa %s9, 0
    %11 = vsyncpa [#allocation4], 0
    %s12 = scalar_lea.sflag [#allocation4], 1
    %13 = vsyncpa %s12, 0
    loop: start=0, step=1, limit=4
    $region2: #{tpu_custom_call.1} parent=1 // loop_pre_header
      _
    $region3: #{tpu_custom_call.1} parent=1 // loop_header
      %s15 = sphi 0, %s19
      %p16 = scmp.ge.s32.totalorder %s15, 4
      %s22 = sphi 0, %s34
      %s23 = sphi 0, %s30
      %s24 = sphi 0, %s22
      %s25 = sphi 0, %s23
      %s26 = sphi 0, %s24
      %s27 = sphi 0, %s25
      %s37 = sphi 0, %s39
      %s40 = sphi 0, %s37
      %s41 = sphi 0, %s40
      %s57 = sphi 0, %s41
      %s63 = sphi 0, %s65
      %s66 = sphi 0, %s63
      %s67 = sphi 0, %s66
      %s83 = sphi 0, %s67
      %s91 = sphi 0, %s93
      %s94 = sphi 0, %s91
      %s95 = sphi 0, %s94
      %s111 = sphi 0, %s95
    $region4: #{tpu_custom_call.1} parent=1 // loop_header_branch
      %18 = sbr.rel (%p16) target = $region8
    $region5: #{tpu_custom_call.1} parent=1 // loop_body
      %s20 = ssub.s32 %s15, 1
      %s21 = ssub.s32 %s15, 2
      %s28 = sadd.s32 1, %s23
      %p29 = scmp.ge.s32.totalorder %s28, 2
      %s30 = scalar_select %p29, 0, %s28
      %s31 = sadd.s32 1, %s22
      %s32 = scalar_select %p29, %s31, %s22
      %p33 = scmp.ge.s32.totalorder %s32, 1
      %s34 = scalar_select %p33, 0, %s32
      %s35 = ssub.s32 %s22, %s34
      %p36 = scmp.eq.s32.totalorder %s35, 0
      %s38 = sadd.s32 %s37, 1
      %s39 = scalar_select %p36, %s37, %s38
      %p42 = pneg %p36
      %p43 = scmp.eq.s32.totalorder %s15, 1
      %p44 = por %p42, %p43
      %p45 = scmp.ne.s32.totalorder %s37, %s40
      %p46 = scmp.eq.s32.totalorder %s15, 0
      %p47 = por %p45, %p46
      %p48 = scmp.ne.s32.totalorder %s37, %s40
      %p49 = scmp.eq.s32.totalorder %s20, 1
      %p50 = por %p48, %p49
      %p51 = scmp.ne.s32.totalorder %s40, %s41
      %p52 = scmp.eq.s32.totalorder %s20, 0
      %p53 = por %p51, %p52
      %p54 = scmp.ne.s32.totalorder %s40, %s41
      %p55 = scmp.eq.s32.totalorder %s21, 1
      %p56 = por %p54, %p55
      %p58 = scmp.ne.s32.totalorder %s41, %s57
      %p59 = scmp.eq.s32.totalorder %s21, 0
      %p60 = por %p58, %p59
      %s61 = ssub.s32 %s23, %s30
      %p62 = scmp.eq.s32.totalorder %s61, 0
      %s64 = sadd.s32 %s63, 1
      %s65 = scalar_select %p62, %s63, %s64
      %p68 = pneg %p62
      %p69 = scmp.eq.s32.totalorder %s15, 1
      %p70 = por %p68, %p69
      %p71 = scmp.ne.s32.totalorder %s63, %s66
      %p72 = scmp.eq.s32.totalorder %s15, 0
      %p73 = por %p71, %p72
      %p74 = scmp.ne.s32.totalorder %s63, %s66
      %p75 = scmp.eq.s32.totalorder %s20, 1
      %p76 = por %p74, %p75
      %p77 = scmp.ne.s32.totalorder %s66, %s67
      %p78 = scmp.eq.s32.totalorder %s20, 0
      %p79 = por %p77, %p78
      %p80 = scmp.ne.s32.totalorder %s66, %s67
      %p81 = scmp.eq.s32.totalorder %s21, 1
      %p82 = por %p80, %p81
      %p84 = scmp.ne.s32.totalorder %s67, %s83
      %p85 = scmp.eq.s32.totalorder %s21, 0
      %p86 = por %p84, %p85
      %s87 = ssub.s32 %s22, %s34
      %s88 = ssub.s32 %s23, %s30
      %s89 = sor.u32 %s87, %s88
      %p90 = scmp.eq.s32.totalorder %s89, 0
      %s92 = sadd.s32 %s91, 1
      %s93 = scalar_select %p90, %s91, %s92
      %p96 = pneg %p90
      %p97 = scmp.eq.s32.totalorder %s15, 1
      %p98 = por %p96, %p97
      %p99 = scmp.ne.s32.totalorder %s91, %s94
      %p100 = scmp.eq.s32.totalorder %s15, 0
      %p101 = por %p99, %p100
      %p102 = scmp.ne.s32.totalorder %s91, %s94
      %p103 = scmp.eq.s32.totalorder %s20, 1
      %p104 = por %p102, %p103
      %p105 = scmp.ne.s32.totalorder %s94, %s95
      %p106 = scmp.eq.s32.totalorder %s20, 0
      %p107 = por %p105, %p106
      %p108 = scmp.ne.s32.totalorder %s94, %s95
      %p109 = scmp.eq.s32.totalorder %s21, 1
      %p110 = por %p108, %p109
      %p112 = scmp.ne.s32.totalorder %s95, %s111
      %p113 = scmp.eq.s32.totalorder %s21, 0
      %p114 = por %p112, %p113
      %p115 = scmp.le.s32.totalorder 1, %s15
      %p116 = scmp.lt.s32.totalorder %s15, 3
      %p117 = pnand %p115, %p116
      %p118 = pneg %p117
      // Predicated region
      $region9: #{tpu_custom_call.1} parent=5 // pred_check
        _
      $region10: #{tpu_custom_call.1} parent=5 // pred_check_branch
        %120 = sbr.rel (%p117) target = $region12
      $region11: #{tpu_custom_call.1} parent=5 // pred_region
        %s121 = ssub.s32 %s15, 1
        // Predicated region
        $region13: #{tpu_custom_call.1} parent=11 // pred_check
          %p122 = pneg %p53
        $region14: #{tpu_custom_call.1} parent=11 // pred_check_branch
          %124 = sbr.rel (%p122) target = $region16
        $region15: #{tpu_custom_call.1} parent=11 // pred_region
          %s125 = smul.u32 32, %s24
          %s127 = ssub.s32 4096, 4096
          %128 = vsyncadd [#allocation3], %s127
          %s129 = smul.addr %s125, 128
          %s130 = scalar_lea.hbm %s0, %s129
          %s131 = sshll.u32 [#allocation2], 4
          %s132 = int_to_ptr.vmem [resolvable:$true] %s131
          %137 = dma.hbm_to_vmem [thread:$0]  %s130, 4096, %s132, [#allocation3], 128, 128, 8
        $region16: #{tpu_custom_call.1} parent=11 // pred_fallthru
          _
      $region12: #{tpu_custom_call.1} parent=5 // pred_fallthru
        _
      %p138 = scmp.lt.s32.totalorder %s15, 2
      // Predicated region
      $region17: #{tpu_custom_call.1} parent=5 // pred_check
        %p139 = pneg %p138
      $region18: #{tpu_custom_call.1} parent=5 // pred_check_branch
        %141 = sbr.rel (%p139) target = $region20
      $region19: #{tpu_custom_call.1} parent=5 // pred_region
        // Predicated region
        $region21: #{tpu_custom_call.1} parent=19 // pred_check
          %p142 = pneg %p73
        $region22: #{tpu_custom_call.1} parent=19 // pred_check_branch
          %144 = sbr.rel (%p142) target = $region24
        $region23: #{tpu_custom_call.1} parent=19 // pred_region
          %s145 = sand.u32 %s63, 1
          %s146 = scalar_lea.sflag [#allocation6], %s145
          %s147 = sand.u32 %s63, 1
          %s148 = smul.addr %s147, 128
          %s149 = scalar_lea.vmem [#allocation5], %s148
          %s151 = ssub.s32 2048, 2048
          %152 = vsyncadd %s146, %s151
          %s153 = smul.addr %s23, 128
          %s154 = scalar_lea.hbm %s1, %s153
          %s155 = sshll.u32 %s149, 4
          %s156 = int_to_ptr.vmem [resolvable:$true] %s155
          %161 = dma.hbm_to_vmem [thread:$0]  %s154, 2048, %s156, %s146, 256, 128, 8
        $region24: #{tpu_custom_call.1} parent=19 // pred_fallthru
          _
      $region20: #{tpu_custom_call.1} parent=5 // pred_fallthru
        _
      %p162 = scmp.le.s32.totalorder 1, %s15
      %p163 = scmp.lt.s32.totalorder %s15, 3
      %p164 = pnand %p162, %p163
      %p165 = pneg %p164
      // Predicated region
      $region25: #{tpu_custom_call.1} parent=5 // pred_check
        _
      $region26: #{tpu_custom_call.1} parent=5 // pred_check_branch
        %167 = sbr.rel (%p164) target = $region28
      $region27: #{tpu_custom_call.1} parent=5 // pred_region
        %s168 = ssub.s32 %s15, 1
        // Predicated region
        $region29: #{tpu_custom_call.1} parent=27 // pred_check
          %p169 = pneg %p53
        $region30: #{tpu_custom_call.1} parent=27 // pred_check_branch
          %171 = sbr.rel (%p169) target = $region32
        $region31: #{tpu_custom_call.1} parent=27 // pred_region
          %172 = dma.done [#allocation3], 4096
        $region32: #{tpu_custom_call.1} parent=27 // pred_fallthru
          _
        %s173 = sand.u32 %s66, 1
        %s174 = scalar_lea.sflag [#allocation6], %s173
        %s175 = sand.u32 %s66, 1
        %s176 = smul.addr %s175, 128
        %s177 = scalar_lea.vmem [#allocation5], %s176
        // Predicated region
        $region33: #{tpu_custom_call.1} parent=27 // pred_check
          %p178 = pneg %p79
        $region34: #{tpu_custom_call.1} parent=27 // pred_check_branch
          %180 = sbr.rel (%p178) target = $region36
        $region35: #{tpu_custom_call.1} parent=27 // pred_region
          %181 = dma.done %s174, 2048
        $region36: #{tpu_custom_call.1} parent=27 // pred_fallthru
          _
        %p182 = pneg %p53
        %p183 = pneg %p50
        %s184 = sand.u32 %s66, 1
        %s185 = scalar_lea.sflag [#allocation6], %s184
        %s186 = sand.u32 %s66, 1
        %s187 = smul.addr %s186, 128
        %s188 = scalar_lea.vmem [#allocation5], %s187
        %p189 = pneg %p79
        %p190 = pneg %p76
        %p191 = pneg %p107
        %p192 = pneg %p104
        %s193 = sand.u32 %s94, 1
        %s194 = scalar_lea.sflag [#allocation4], %s193
        %s195 = sand.u32 %s94, 1
        %s196 = smul.addr %s195, 256
        %s197 = scalar_lea.vmem [#allocation7], %s196
        %s198 = smul.u32 32, %s24
        %s199 = smul.u32 32, %s24
        %v200 = vld [vmem:[#allocation2] sm:$0xff]
        %v201 = vld [vmem:[#allocation2 + $0x8] sm:$0xff]
        %v202 = vld [vmem:[#allocation2 + $0x10] sm:$0xff]
        %v203 = vld [vmem:[#allocation2 + $0x18] sm:$0xff]
        %v204 = vld [vmem:[#allocation2 + $0x20] sm:$0xff]
        %v205 = vld [vmem:[#allocation2 + $0x28] sm:$0xff]
        %v206 = vld [vmem:[#allocation2 + $0x30] sm:$0xff]
        %v207 = vld [vmem:[#allocation2 + $0x38] sm:$0xff]
        %v208 = vld [vmem:[#allocation2 + $0x40] sm:$0xff]
        %v209 = vld [vmem:[#allocation2 + $0x48] sm:$0xff]
        %v210 = vld [vmem:[#allocation2 + $0x50] sm:$0xff]
        %v211 = vld [vmem:[#allocation2 + $0x58] sm:$0xff]
        %v212 = vld [vmem:[#allocation2 + $0x60] sm:$0xff]
        %v213 = vld [vmem:[#allocation2 + $0x68] sm:$0xff]
        %v214 = vld [vmem:[#allocation2 + $0x70] sm:$0xff]
        %v215 = vld [vmem:[#allocation2 + $0x78] sm:$0xff]
        %v216 = vld [vmem:[#allocation2 + $0x80] sm:$0xff]
        %v217 = vld [vmem:[#allocation2 + $0x88] sm:$0xff]
        %v218 = vld [vmem:[#allocation2 + $0x90] sm:$0xff]
        %v219 = vld [vmem:[#allocation2 + $0x98] sm:$0xff]
        %v220 = vld [vmem:[#allocation2 + $0xa0] sm:$0xff]
        %v221 = vld [vmem:[#allocation2 + $0xa8] sm:$0xff]
        %v222 = vld [vmem:[#allocation2 + $0xb0] sm:$0xff]
        %v223 = vld [vmem:[#allocation2 + $0xb8] sm:$0xff]
        %v224 = vld [vmem:[#allocation2 + $0xc0] sm:$0xff]
        %v225 = vld [vmem:[#allocation2 + $0xc8] sm:$0xff]
        %v226 = vld [vmem:[#allocation2 + $0xd0] sm:$0xff]
        %v227 = vld [vmem:[#allocation2 + $0xd8] sm:$0xff]
        %v228 = vld [vmem:[#allocation2 + $0xe0] sm:$0xff]
        %v229 = vld [vmem:[#allocation2 + $0xe8] sm:$0xff]
        %v230 = vld [vmem:[#allocation2 + $0xf0] sm:$0xff]
        %v231 = vld [vmem:[#allocation2 + $0xf8] sm:$0xff]
        %v232 = vld [vmem:[%s177] sm:$0xff]
        %v233 = vld [vmem:[%s177 + $0x8] sm:$0xff]
        %v234 = vld [vmem:[%s177 + $0x10] sm:$0xff]
        %v235 = vld [vmem:[%s177 + $0x18] sm:$0xff]
        %v236 = vld [vmem:[%s177 + $0x20] sm:$0xff]
        %v237 = vld [vmem:[%s177 + $0x28] sm:$0xff]
        %v238 = vld [vmem:[%s177 + $0x30] sm:$0xff]
        %v239 = vld [vmem:[%s177 + $0x38] sm:$0xff]
        %v240 = vld [vmem:[%s177 + $0x40] sm:$0xff]
        %v241 = vld [vmem:[%s177 + $0x48] sm:$0xff]
        %v242 = vld [vmem:[%s177 + $0x50] sm:$0xff]
        %v243 = vld [vmem:[%s177 + $0x58] sm:$0xff]
        %v244 = vld [vmem:[%s177 + $0x60] sm:$0xff]
        %v245 = vld [vmem:[%s177 + $0x68] sm:$0xff]
        %v246 = vld [vmem:[%s177 + $0x70] sm:$0xff]
        %v247 = vld [vmem:[%s177 + $0x78] sm:$0xff]
        %248 = vmatprep.subr.mxu0 0.0
        %249 = vmatpush1.msra.mxu0 %v232
        %250 = vmatprep.subr.mxu0 0.0
        %251 = vmatpush1.msra.mxu0 %v233
        %252 = vmatprep.subr.mxu0 0.0
        %253 = vmatpush1.msra.mxu0 %v234
        %254 = vmatprep.subr.mxu0 0.0
        %255 = vmatpush1.msra.mxu0 %v235
        %256 = vmatprep.subr.mxu0 0.0
        %257 = vmatpush1.msra.mxu0 %v236
        %258 = vmatprep.subr.mxu0 0.0
        %259 = vmatpush1.msra.mxu0 %v237
        %260 = vmatprep.subr.mxu0 0.0
        %261 = vmatpush1.msra.mxu0 %v238
        %262 = vmatprep.subr.mxu0 0.0
        %263 = vmatpush1.msra.mxu0 %v239
        %264 = vmatprep.subr.mxu0 0.0
        %265 = vmatpush1.msra.mxu0 %v240
        %266 = vmatprep.subr.mxu0 0.0
        %267 = vmatpush1.msra.mxu0 %v241
        %268 = vmatprep.subr.mxu0 0.0
        %269 = vmatpush1.msra.mxu0 %v242
        %270 = vmatprep.subr.mxu0 0.0
        %271 = vmatpush1.msra.mxu0 %v243
        %272 = vmatprep.subr.mxu0 0.0
        %273 = vmatpush1.msra.mxu0 %v244
        %274 = vmatprep.subr.mxu0 0.0
        %275 = vmatpush1.msra.mxu0 %v245
        %276 = vmatprep.subr.mxu0 0.0
        %277 = vmatpush1.msra.mxu0 %v246
        %278 = vmatprep.subr.mxu0 0.0
        %279 = vmatpush1.msra.mxu0 %v247
        %280 = vmatprep.subr.mxu0 0.0
        %281 = vmatpush1.msra.mxu0 0.0
        %282 = vmatprep.subr.mxu0 0.0
        %283 = vmatpush1.msra.mxu0 0.0
        %284 = vmatprep.subr.mxu0 0.0
        %285 = vmatpush1.msra.mxu0 0.0
        %286 = vmatprep.subr.mxu0 0.0
        %287 = vmatpush1.msra.mxu0 0.0
        %288 = vmatprep.subr.mxu0 0.0
        %289 = vmatpush1.msra.mxu0 0.0
        %290 = vmatprep.subr.mxu0 0.0
        %291 = vmatpush1.msra.mxu0 0.0
        %292 = vmatprep.subr.mxu0 0.0
        %293 = vmatpush1.msra.mxu0 0.0
        %294 = vmatprep.subr.mxu0 0.0
        %295 = vmatpush1.msra.mxu0 0.0
        %296 = vmatprep.subr.mxu0 0.0
        %297 = vmatpush1.msra.mxu0 0.0
        %298 = vmatprep.subr.mxu0 0.0
        %299 = vmatpush1.msra.mxu0 0.0
        %300 = vmatprep.subr.mxu0 0.0
        %301 = vmatpush1.msra.mxu0 0.0
        %302 = vmatprep.subr.mxu0 0.0
        %303 = vmatpush1.msra.mxu0 0.0
        %304 = vmatprep.subr.mxu0 0.0
        %305 = vmatpush1.msra.mxu0 0.0
        %306 = vmatprep.subr.mxu0 0.0
        %307 = vmatpush1.msra.mxu0 0.0
        %308 = vmatprep.subr.mxu0 0.0
        %309 = vmatpush1.msra.mxu0 0.0
        %310 = vmatprep.subr.mxu0 0.0
        %311 = vmatpush1.msra.mxu0 0.0
        %312 = vmatprep.mubr.f32.mxu0 0.0
        %313 = vmatmul.mubr.f32.gmra.mrb[0].mxu0 %v200
        %v314 = vpop.f32.mrb[0].mxu0
        %v315 = vadd.f32 0.0, %v314
        %v316 = vpop.f32.mrb[0].mxu0
        %317 = vmatprep.mubr.f32.mxu0 0.0
        %318 = vmatmul.mubr.f32.gmra.mrb[0].mxu0 %v201
        %v319 = vpop.f32.mrb[0].mxu0
        %v320 = vadd.f32 0.0, %v319
        %v321 = vpop.f32.mrb[0].mxu0
        %322 = vmatprep.mubr.f32.mxu0 0.0
        %323 = vmatmul.mubr.f32.gmra.mrb[0].mxu0 %v202
        %v324 = vpop.f32.mrb[0].mxu0
        %v325 = vadd.f32 0.0, %v324
        %v326 = vpop.f32.mrb[0].mxu0
        %327 = vmatprep.mubr.f32.mxu0 0.0
        %328 = vmatmul.mubr.f32.gmra.mrb[0].mxu0 %v203
        %v329 = vpop.f32.mrb[0].mxu0
        %v330 = vadd.f32 0.0, %v329
        %v331 = vpop.f32.mrb[0].mxu0
        %332 = vmatprep.mubr.f32.mxu0 0.0
        %333 = vmatmul.mubr.f32.gmra.mrb[0].mxu0 %v204
        %v334 = vpop.f32.mrb[0].mxu0
        %v335 = vadd.f32 0.0, %v334
        %v336 = vpop.f32.mrb[0].mxu0
        %337 = vmatprep.mubr.f32.mxu0 0.0
        %338 = vmatmul.mubr.f32.gmra.mrb[0].mxu0 %v205
        %v339 = vpop.f32.mrb[0].mxu0
        %v340 = vadd.f32 0.0, %v339
        %v341 = vpop.f32.mrb[0].mxu0
        %342 = vmatprep.mubr.f32.mxu0 0.0
        %343 = vmatmul.mubr.f32.gmra.mrb[0].mxu0 %v206
        %v344 = vpop.f32.mrb[0].mxu0
        %v345 = vadd.f32 0.0, %v344
        %v346 = vpop.f32.mrb[0].mxu0
        %347 = vmatprep.mubr.f32.mxu0 0.0
        %348 = vmatmul.mubr.f32.gmra.mrb[0].mxu0 %v207
        %v349 = vpop.f32.mrb[0].mxu0
        %v350 = vadd.f32 0.0, %v349
        %v351 = vpop.f32.mrb[0].mxu0
        %352 = vmatprep.mubr.f32.mxu0 0.0
        %353 = vmatmul.mubr.f32.gmra.mrb[0].mxu0 %v208
        %v354 = vpop.f32.mrb[0].mxu0
        %v355 = vadd.f32 0.0, %v354
        %v356 = vpop.f32.mrb[0].mxu0
        %357 = vmatprep.mubr.f32.mxu0 0.0
        %358 = vmatmul.mubr.f32.gmra.mrb[0].mxu0 %v209
        %v359 = vpop.f32.mrb[0].mxu0
        %v360 = vadd.f32 0.0, %v359
        %v361 = vpop.f32.mrb[0].mxu0
        %362 = vmatprep.mubr.f32.mxu0 0.0
        %363 = vmatmul.mubr.f32.gmra.mrb[0].mxu0 %v210
        %v364 = vpop.f32.mrb[0].mxu0
        %v365 = vadd.f32 0.0, %v364
        %v366 = vpop.f32.mrb[0].mxu0
        %367 = vmatprep.mubr.f32.mxu0 0.0
        %368 = vmatmul.mubr.f32.gmra.mrb[0].mxu0 %v211
        %v369 = vpop.f32.mrb[0].mxu0
        %v370 = vadd.f32 0.0, %v369
        %v371 = vpop.f32.mrb[0].mxu0
        %372 = vmatprep.mubr.f32.mxu0 0.0
        %373 = vmatmul.mubr.f32.gmra.mrb[0].mxu0 %v212
        %v374 = vpop.f32.mrb[0].mxu0
        %v375 = vadd.f32 0.0, %v374
        %v376 = vpop.f32.mrb[0].mxu0
        %377 = vmatprep.mubr.f32.mxu0 0.0
        %378 = vmatmul.mubr.f32.gmra.mrb[0].mxu0 %v213
        %v379 = vpop.f32.mrb[0].mxu0
        %v380 = vadd.f32 0.0, %v379
        %v381 = vpop.f32.mrb[0].mxu0
        %382 = vmatprep.mubr.f32.mxu0 0.0
        %383 = vmatmul.mubr.f32.gmra.mrb[0].mxu0 %v214
        %v384 = vpop.f32.mrb[0].mxu0
        %v385 = vadd.f32 0.0, %v384
        %v386 = vpop.f32.mrb[0].mxu0
        %387 = vmatprep.mubr.f32.mxu0 0.0
        %388 = vmatmul.mubr.f32.gmra.mrb[0].mxu0 %v215
        %v389 = vpop.f32.mrb[0].mxu0
        %v390 = vadd.f32 0.0, %v389
        %v391 = vpop.f32.mrb[0].mxu0
        %392 = vmatprep.mubr.f32.mxu0 0.0
        %393 = vmatmul.mubr.f32.gmra.mrb[0].mxu0 %v216
        %v394 = vpop.f32.mrb[0].mxu0
        %v395 = vadd.f32 0.0, %v394
        %v396 = vpop.f32.mrb[0].mxu0
        %397 = vmatprep.mubr.f32.mxu0 0.0
        %398 = vmatmul.mubr.f32.gmra.mrb[0].mxu0 %v217
        %v399 = vpop.f32.mrb[0].mxu0
        %v400 = vadd.f32 0.0, %v399
        %v401 = vpop.f32.mrb[0].mxu0
        %402 = vmatprep.mubr.f32.mxu0 0.0
        %403 = vmatmul.mubr.f32.gmra.mrb[0].mxu0 %v218
        %v404 = vpop.f32.mrb[0].mxu0
        %v405 = vadd.f32 0.0, %v404
        %v406 = vpop.f32.mrb[0].mxu0
        %407 = vmatprep.mubr.f32.mxu0 0.0
        %408 = vmatmul.mubr.f32.gmra.mrb[0].mxu0 %v219
        %v409 = vpop.f32.mrb[0].mxu0
        %v410 = vadd.f32 0.0, %v409
        %v411 = vpop.f32.mrb[0].mxu0
        %412 = vmatprep.mubr.f32.mxu0 0.0
        %413 = vmatmul.mubr.f32.gmra.mrb[0].mxu0 %v220
        %v414 = vpop.f32.mrb[0].mxu0
        %v415 = vadd.f32 0.0, %v414
        %v416 = vpop.f32.mrb[0].mxu0
        %417 = vmatprep.mubr.f32.mxu0 0.0
        %418 = vmatmul.mubr.f32.gmra.mrb[0].mxu0 %v221
        %v419 = vpop.f32.mrb[0].mxu0
        %v420 = vadd.f32 0.0, %v419
        %v421 = vpop.f32.mrb[0].mxu0
        %422 = vmatprep.mubr.f32.mxu0 0.0
        %423 = vmatmul.mubr.f32.gmra.mrb[0].mxu0 %v222
        %v424 = vpop.f32.mrb[0].mxu0
        %v425 = vadd.f32 0.0, %v424
        %v426 = vpop.f32.mrb[0].mxu0
        %427 = vmatprep.mubr.f32.mxu0 0.0
        %428 = vmatmul.mubr.f32.gmra.mrb[0].mxu0 %v223
        %v429 = vpop.f32.mrb[0].mxu0
        %v430 = vadd.f32 0.0, %v429
        %v431 = vpop.f32.mrb[0].mxu0
        %432 = vmatprep.mubr.f32.mxu0 0.0
        %433 = vmatmul.mubr.f32.gmra.mrb[0].mxu0 %v224
        %v434 = vpop.f32.mrb[0].mxu0
        %v435 = vadd.f32 0.0, %v434
        %v436 = vpop.f32.mrb[0].mxu0
        %437 = vmatprep.mubr.f32.mxu0 0.0
        %438 = vmatmul.mubr.f32.gmra.mrb[0].mxu0 %v225
        %v439 = vpop.f32.mrb[0].mxu0
        %v440 = vadd.f32 0.0, %v439
        %v441 = vpop.f32.mrb[0].mxu0
        %442 = vmatprep.mubr.f32.mxu0 0.0
        %443 = vmatmul.mubr.f32.gmra.mrb[0].mxu0 %v226
        %v444 = vpop.f32.mrb[0].mxu0
        %v445 = vadd.f32 0.0, %v444
        %v446 = vpop.f32.mrb[0].mxu0
        %447 = vmatprep.mubr.f32.mxu0 0.0
        %448 = vmatmul.mubr.f32.gmra.mrb[0].mxu0 %v227
        %v449 = vpop.f32.mrb[0].mxu0
        %v450 = vadd.f32 0.0, %v449
        %v451 = vpop.f32.mrb[0].mxu0
        %452 = vmatprep.mubr.f32.mxu0 0.0
        %453 = vmatmul.mubr.f32.gmra.mrb[0].mxu0 %v228
        %v454 = vpop.f32.mrb[0].mxu0
        %v455 = vadd.f32 0.0, %v454
        %v456 = vpop.f32.mrb[0].mxu0
        %457 = vmatprep.mubr.f32.mxu0 0.0
        %458 = vmatmul.mubr.f32.gmra.mrb[0].mxu0 %v229
        %v459 = vpop.f32.mrb[0].mxu0
        %v460 = vadd.f32 0.0, %v459
        %v461 = vpop.f32.mrb[0].mxu0
        %462 = vmatprep.mubr.f32.mxu0 0.0
        %463 = vmatmul.mubr.f32.gmra.mrb[0].mxu0 %v230
        %v464 = vpop.f32.mrb[0].mxu0
        %v465 = vadd.f32 0.0, %v464
        %v466 = vpop.f32.mrb[0].mxu0
        %467 = vmatprep.mubr.f32.mxu0 0.0
        %468 = vmatmul.mubr.f32.gmra.mrb[0].mxu0 %v231
        %v469 = vpop.f32.mrb[0].mxu0
        %v470 = vadd.f32 0.0, %v469
        %v471 = vpop.f32.mrb[0].mxu0
        %472 = vdwg.mxu0
        %473 = vst [vmem:[%s197] sm:$0xff] %v315
        %474 = vst [vmem:[%s197 + $0x8] sm:$0xff] %v320
        %475 = vst [vmem:[%s197 + $0x10] sm:$0xff] %v325
        %476 = vst [vmem:[%s197 + $0x18] sm:$0xff] %v330
        %477 = vst [vmem:[%s197 + $0x20] sm:$0xff] %v335
        %478 = vst [vmem:[%s197 + $0x28] sm:$0xff] %v340
        %479 = vst [vmem:[%s197 + $0x30] sm:$0xff] %v345
        %480 = vst [vmem:[%s197 + $0x38] sm:$0xff] %v350
        %481 = vst [vmem:[%s197 + $0x40] sm:$0xff] %v355
        %482 = vst [vmem:[%s197 + $0x48] sm:$0xff] %v360
        %483 = vst [vmem:[%s197 + $0x50] sm:$0xff] %v365
        %484 = vst [vmem:[%s197 + $0x58] sm:$0xff] %v370
        %485 = vst [vmem:[%s197 + $0x60] sm:$0xff] %v375
        %486 = vst [vmem:[%s197 + $0x68] sm:$0xff] %v380
        %487 = vst [vmem:[%s197 + $0x70] sm:$0xff] %v385
        %488 = vst [vmem:[%s197 + $0x78] sm:$0xff] %v390
        %489 = vst [vmem:[%s197 + $0x80] sm:$0xff] %v395
        %490 = vst [vmem:[%s197 + $0x88] sm:$0xff] %v400
        %491 = vst [vmem:[%s197 + $0x90] sm:$0xff] %v405
        %492 = vst [vmem:[%s197 + $0x98] sm:$0xff] %v410
        %493 = vst [vmem:[%s197 + $0xa0] sm:$0xff] %v415
        %494 = vst [vmem:[%s197 + $0xa8] sm:$0xff] %v420
        %495 = vst [vmem:[%s197 + $0xb0] sm:$0xff] %v425
        %496 = vst [vmem:[%s197 + $0xb8] sm:$0xff] %v430
        %497 = vst [vmem:[%s197 + $0xc0] sm:$0xff] %v435
        %498 = vst [vmem:[%s197 + $0xc8] sm:$0xff] %v440
        %499 = vst [vmem:[%s197 + $0xd0] sm:$0xff] %v445
        %500 = vst [vmem:[%s197 + $0xd8] sm:$0xff] %v450
        %501 = vst [vmem:[%s197 + $0xe0] sm:$0xff] %v455
        %502 = vst [vmem:[%s197 + $0xe8] sm:$0xff] %v460
        %503 = vst [vmem:[%s197 + $0xf0] sm:$0xff] %v465
        %504 = vst [vmem:[%s197 + $0xf8] sm:$0xff] %v470
        %s505 = sand.u32 %s94, 1
        %s506 = scalar_lea.sflag [#allocation4], %s505
        %s507 = sand.u32 %s94, 1
        %s508 = smul.addr %s507, 256
        %s509 = scalar_lea.vmem [#allocation7], %s508
        // Predicated region
        $region37: #{tpu_custom_call.1} parent=27 // pred_check
          %p510 = pneg %p104
        $region38: #{tpu_custom_call.1} parent=27 // pred_check_branch
          %512 = sbr.rel (%p510) target = $region40
        $region39: #{tpu_custom_call.1} parent=27 // pred_region
          %s513 = smul.u32 32, %s24
          %s515 = ssub.s32 4096, 4096
          %516 = vsyncadd %s506, %s515
          %s517 = smul.addr %s513, 2
          %s518 = sadd.s32 %s25, %s517
          %s519 = smul.addr %s518, 128
          %s520 = scalar_lea.hbm %s2, %s519
          %s521 = sshll.u32 %s509, 4
          %s522 = int_to_ptr.vmem [resolvable:$true] %s521
          %527 = dma.vmem_to_hbm [thread:$0]  %s522, 4096, %s520, %s506, 128, 256, 8
        $region40: #{tpu_custom_call.1} parent=27 // pred_fallthru
          _
      $region28: #{tpu_custom_call.1} parent=5 // pred_fallthru
        _
      %p528 = scmp.le.s32.totalorder 2, %s15
      // Predicated region
      $region41: #{tpu_custom_call.1} parent=5 // pred_check
        %p529 = pneg %p528
      $region42: #{tpu_custom_call.1} parent=5 // pred_check_branch
        %531 = sbr.rel (%p529) target = $region44
      $region43: #{tpu_custom_call.1} parent=5 // pred_region
        %s532 = ssub.s32 %s15, 2
        // Predicated region
        $region45: #{tpu_custom_call.1} parent=43 // pred_check
          %p533 = pneg %p110
        $region46: #{tpu_custom_call.1} parent=43 // pred_check_branch
          %535 = sbr.rel (%p533) target = $region48
        $region47: #{tpu_custom_call.1} parent=43 // pred_region
          %s536 = sand.u32 %s95, 1
          %s537 = scalar_lea.sflag [#allocation4], %s536
          %s538 = sand.u32 %s95, 1
          %s539 = smul.addr %s538, 256
          %s540 = scalar_lea.vmem [#allocation7], %s539
          %541 = dma.done %s537, 4096
        $region48: #{tpu_custom_call.1} parent=43 // pred_fallthru
          _
      $region44: #{tpu_custom_call.1} parent=5 // pred_fallthru
        _
    $region6: #{tpu_custom_call.1} parent=1 // loop_footer
      %s19 = sadd.s32 1, %s15
    $region7: #{tpu_custom_call.1} parent=1 // loop_footer_branch
      %14 = sbr.rel target = $region3
    $region8: #{tpu_custom_call.1} parent=1 // loop_exit
      _
    %542 = vsyncpa [#allocation3], 1
    %s543 = scalar_lea.sflag [#allocation3], 1
    %544 = vsyncpa %s543, 1
    %545 = vsyncpa [#allocation6], 1
    %s546 = scalar_lea.sflag [#allocation6], 1
    %547 = vsyncpa %s546, 1
    %548 = vsyncpa [#allocation4], 1
    %s549 = scalar_lea.sflag [#allocation4], 1
    %550 = vsyncpa %s549, 1

</llo_original>
